<compile_context>
chip_gen: v7x
topology: tpu7x:2x2x1
jax: 0.10.0
libtpu: 0.0.40
codegen_flags: <defaults>
</compile_context>

<pallas_src>
import functools
from typing import NamedTuple

import jax
import jax.numpy as jnp
from jax.experimental import pallas as pl
from jax.experimental.pallas import tpu as pltpu

BN_EPS = 1e-5


def _round_up(x: int, m: int) -> int:
    return (x + m - 1) // m * m


class Plan(NamedTuple):
    B: int
    In: int
    Out: int
    b_p: int
    in_p: int
    out_p: int
    tn: int
    tk: int
    x_resident: bool
    use_mxu_stats: bool
    vmem_limit: int


def plan_mlp_layer(B: int, In: int, Out: int, *, tn: int = 256, tk: int = 256,
                   vmem_budget: int = 40 << 20) -> Plan:
    """Choose tiles / residency / VMEM limit once per (B, In, Out)."""
    b_p = _round_up(B, 16)                      # bf16 sublane packing: 16 rows per vreg
    out_128 = _round_up(Out, 128)
    tn = min(tn, out_128)
    # v7x has 2 TensorCores: make sure the "parallel" feature axis has >=2 tiles
    # whenever the padded feature count allows it.
    if out_128 // tn < 2 and out_128 >= 256:
        tn = 128
    out_p = _round_up(Out, tn)
    tk = min(tk, _round_up(In, 128))
    in_p = _round_up(In, tk)

    def vmem_est(resident: bool, tk_: int, in_p_: int) -> int:
        x_b = 2 * b_p * (in_p_ if resident else tk_) * 2   # bf16, double-buffered
        w_b = 2 * tk_ * tn * 2                              # bf16, double-buffered
        o_b = 2 * b_p * tn * 4                              # f32 resident out tile, 2 buffers
        return x_b + w_b + o_b + (1 << 20)                  # gamma/beta + slack

    x_resident = vmem_est(True, tk, in_p) <= vmem_budget
    if (not x_resident) and vmem_est(False, tk, in_p) > vmem_budget and tk > 128:
        tk = 128                                            # shrink K depth, never M / out-N
        in_p = _round_up(In, tk)

    est = vmem_est(x_resident, tk, in_p)
    # Explicit scoped-VMEM limit with headroom, kept under v7x's 64 MiB physical.
    vmem_limit = int(min(max(2 * est, 32 << 20), 56 << 20))
    use_mxu_stats = b_p >= 512                              # MXU column sums pay off for large B
    return Plan(B, In, Out, b_p, in_p, out_p, tn, tk, x_resident, use_mxu_stats, vmem_limit)


def prepare_mlp_params(w, gamma, beta, plan: Plan):
    """One-time (batch-independent) padding + casting of the layer parameters.

    w: [In, Out] (nn.Linear.weight transposed); gamma/beta: [Out].
    """
    In, Out, in_p, out_p = plan.In, plan.Out, plan.in_p, plan.out_p
    bf16, f32 = jnp.bfloat16, jnp.float32
    if (In, Out) == (in_p, out_p):
        w_p = w.astype(bf16)
    else:
        w_p = jnp.zeros((in_p, out_p), bf16).at[:In, :Out].set(w.astype(bf16))
    g_p = jnp.zeros((1, out_p), f32).at[0, :Out].set(gamma.reshape(-1).astype(f32))
    be_p = jnp.zeros((1, out_p), f32).at[0, :Out].set(beta.reshape(-1).astype(f32))
    return w_p, g_p, be_p


def _mlp_layer_kernel(x_ref, w_ref, gamma_ref, beta_ref, o_ref, *,
                      inv_batch, tk, x_resident, use_mxu_stats):
    k = pl.program_id(1)

    @pl.when(k == 0)
    def _():
        o_ref[...] = jnp.zeros_like(o_ref)

    if x_resident:
        # Full x lives in VMEM (fetched once); slice out the current K tile.
        x_blk = x_ref[:, pl.ds(pl.multiple_of(k * tk, tk), tk)]
    else:
        x_blk = x_ref[...]

    # Linear (bias dropped -- it cancels exactly under training-mode BN),
    # bf16 MXU feeds, f32 accumulation directly in the resident output tile.
    o_ref[...] += jnp.dot(x_blk, w_ref[...], preferred_element_type=jnp.float32)

    @pl.when(k == pl.num_programs(1) - 1)
    def _():
        y = o_ref[...]                                        # [b_p, tn] f32
        # Padded batch rows of x are zero and there is no bias, so padded rows
        # of y are exactly zero: sums over b_p equal sums over the true B.
        if use_mxu_stats:
            # Large-batch path: cross-sublane sums on the (otherwise idle) MXU.
            ones = jnp.ones((1, y.shape[0]), jnp.float32)
            col_sum = jnp.dot(ones, y, preferred_element_type=jnp.float32)
            col_sumsq = jnp.dot(ones, y * y, preferred_element_type=jnp.float32)
        else:
            col_sum = jnp.sum(y, axis=0, keepdims=True)       # [1, tn]
            col_sumsq = jnp.sum(y * y, axis=0, keepdims=True)
        mean = col_sum * inv_batch
        var = jnp.maximum(col_sumsq * inv_batch - mean * mean, 0.0)
        scale = gamma_ref[...] * jax.lax.rsqrt(var + BN_EPS)  # rsqrt -> EUP slot
        shift = beta_ref[...] - mean * scale
        # Single fused pass over the [b_p, tn] tile: mul + add + relu, in place.
        o_ref[...] = jnp.maximum(y * scale + shift, 0.0).astype(o_ref.dtype)


def mlp_layer_forward(x, w_p, g_p, be_p, plan: Plan):
    """x: [B, In] (any float dtype); parameters pre-padded via prepare_mlp_params."""
    B, In = x.shape
    assert (B, In) == (plan.B, plan.In), "input shape does not match the plan"
    b_p, in_p, out_p, tn, tk = plan.b_p, plan.in_p, plan.out_p, plan.tn, plan.tk

    if (B, In) == (b_p, in_p):
        x_p = x.astype(jnp.bfloat16)                   # no padding pass needed
    else:
        x_p = jnp.zeros((b_p, in_p), jnp.bfloat16).at[:B, :In].set(x.astype(jnp.bfloat16))

    grid = (out_p // tn, in_p // tk)                   # (features: parallel, K: reduction)

    kernel = functools.partial(
        _mlp_layer_kernel,
        inv_batch=1.0 / float(B),
        tk=tk,
        x_resident=plan.x_resident,
        use_mxu_stats=plan.use_mxu_stats,
    )

    if plan.x_resident:
        x_spec = pl.BlockSpec((b_p, in_p), lambda j, k: (0, 0))   # fetched once, stays resident
    else:
        x_spec = pl.BlockSpec((b_p, tk), lambda j, k: (0, k))
    # NOTE: on v6e with small B and exposed W DMA, pipeline_mode=pl.Buffered(3)
    # on the W spec is a further (profile-guided) knob; left at the default here.
    x_refetch = 1 if plan.x_resident else grid[0]

    cost = pl.CostEstimate(
        flops=2 * b_p * in_p * out_p,
        transcendentals=out_p,
        bytes_accessed=(2 * b_p * in_p * x_refetch     # x (bf16), refetch factor applied
                        + 2 * in_p * out_p             # W (bf16)
                        + 4 * b_p * out_p              # out (f32)
                        + 2 * 4 * out_p),              # gamma / beta
    )

    out = pl.pallas_call(
        kernel,
        out_shape=jax.ShapeDtypeStruct((b_p, out_p), jnp.float32),
        grid_spec=pltpu.PrefetchScalarGridSpec(
            num_scalar_prefetch=0,
            grid=grid,
            in_specs=[
                x_spec,                                         # x
                pl.BlockSpec((tk, tn), lambda j, k: (k, j)),    # W
                pl.BlockSpec((1, tn), lambda j, k: (0, j)),     # gamma
                pl.BlockSpec((1, tn), lambda j, k: (0, j)),     # beta
            ],
            out_specs=pl.BlockSpec((b_p, tn), lambda j, k: (0, j)),
        ),
        compiler_params=pltpu.CompilerParams(
            dimension_semantics=("parallel", "arbitrary"),
            vmem_limit_bytes=plan.vmem_limit,
        ),
        cost_estimate=cost,
    )(x_p, w_p, g_p, be_p)

    return out[:B, :plan.Out]


if __name__ == "__main__":
    # Small shapes consistent with the module's forward: x [batch, input_size].
    B, INPUT_SIZE, OUTPUT_SIZE = 8, 32, 32

    key = jax.random.PRNGKey(0)
    k_x, k_w, k_b, k_g, k_be = jax.random.split(key, 5)

    # nn.Linear / nn.BatchNorm1d-shaped synthetic parameters.
    bound = 1.0 / (INPUT_SIZE ** 0.5)
    # nn.Linear.weight is [Out, In]; we carry it transposed as [In, Out].
    w = jax.random.uniform(k_w, (INPUT_SIZE, OUTPUT_SIZE), jnp.float32, -bound, bound)
    b = jax.random.uniform(k_b, (OUTPUT_SIZE,), jnp.float32, -bound, bound)
    gamma = jax.random.uniform(k_g, (OUTPUT_SIZE,), jnp.float32, 0.5, 1.5)
    beta = jax.random.uniform(k_be, (OUTPUT_SIZE,), jnp.float32, -0.5, 0.5)

    x = jax.random.normal(k_x, (B, INPUT_SIZE), jnp.float32)

    plan = plan_mlp_layer(B, INPUT_SIZE, OUTPUT_SIZE)
    w_p, g_p, be_p = prepare_mlp_params(w, gamma, beta, plan)   # one-time, hoisted

    out = mlp_layer_forward(x, w_p, g_p, be_p, plan)
    jax.block_until_ready(out)

    # Reference 1: exact module semantics (f32, bias included) -- confirms the
    # bias drop under training-mode BN; loose tolerance covers the bf16 feeds.
    y_ref = x @ w + b
    m = jnp.mean(y_ref, axis=0, keepdims=True)
    v = jnp.mean((y_ref - m) ** 2, axis=0, keepdims=True)
    ref_exact = jnp.maximum((y_ref - m) / jnp.sqrt(v + BN_EPS) * gamma + beta, 0.0)

    # Reference 2: same math with bf16-rounded inputs (matches the kernel's MXU
    # feed precision), tight tolerance.
    xb = x.astype(jnp.bfloat16).astype(jnp.float32)
    wb = w.astype(jnp.bfloat16).astype(jnp.float32)
    y_bf = xb @ wb
    mb = jnp.mean(y_bf, axis=0, keepdims=True)
    vb = jnp.mean((y_bf - mb) ** 2, axis=0, keepdims=True)
    ref_bf16 = jnp.maximum((y_bf - mb) / jnp.sqrt(vb + BN_EPS) * gamma + beta, 0.0)

    assert out.shape == ref_exact.shape
    assert jnp.allclose(out, ref_bf16, atol=1e-3, rtol=1e-3), \
        float(jnp.max(jnp.abs(out - ref_bf16)))
    assert jnp.allclose(out, ref_exact, atol=3e-2, rtol=3e-2), \
        float(jnp.max(jnp.abs(out - ref_exact)))

    print("KERNEL_OK")
</pallas_src>

<mosaic_0001>
module attributes {stable_mosaic.version = 11 : i64} {
  func.func @_mlp_layer_kernel(%arg0: i32, %arg1: i32, %arg2: memref<16x128xbf16, #tpu.memory_space<vmem>>, %arg3: memref<128x128xbf16, #tpu.memory_space<vmem>>, %arg4: memref<1x128xf32, #tpu.memory_space<vmem>>, %arg5: memref<1x128xf32, #tpu.memory_space<vmem>>, %arg6: memref<16x128xf32, #tpu.memory_space<vmem>>) attributes {dimension_semantics = [#tpu.dimension_semantics<parallel>, #tpu.dimension_semantics<arbitrary>], iteration_bounds = array<i64: 1, 1>, scalar_prefetch = 0 : i64, scratch_operands = 0 : i64, tpu.core_type = #tpu.core_type<tc>, window_params = [{pipeline_mode = #tpu.pipeline_mode<synchronous>, transform_indices = @transform_0, window_bounds = array<i64: 16, 128>}, {transform_indices = @transform_1, window_bounds = array<i64: 128, 128>}, {transform_indices = @transform_2, window_bounds = array<i64: 1, 128>}, {transform_indices = @transform_3, window_bounds = array<i64: 1, 128>}, {transform_indices = @transform_4, window_bounds = array<i64: 16, 128>}]} {
    %c0_i32 = arith.constant 0 : i32
    %0 = arith.cmpi eq, %arg1, %c0_i32 : i32
    %1 = arith.extui %0 : i1 to i32
    %c0_i32_0 = arith.constant 0 : i32
    %2 = arith.cmpi ne, %1, %c0_i32_0 : i32
    scf.if %2 {
      %cst_9 = arith.constant 0.000000e+00 : f32
      %15 = vector.broadcast %cst_9 : f32 to vector<16x128xf32>
      %c0_10 = arith.constant 0 : index
      %c0_11 = arith.constant 0 : index
      %16 = vector.load %arg6[%c0_10, %c0_11] : memref<16x128xf32, #tpu.memory_space<vmem>>, vector<16x128xf32>
      tpu.vector_store %arg6[%c0_10, %c0_11], %15 {strides = array<i32>} : memref<16x128xf32, #tpu.memory_space<vmem>>, vector<16x128xf32>,
    } else {
    }
    %c128_i32 = arith.constant 128 : i32
    %3 = arith.muli %arg1, %c128_i32 : i32
    %4 = tpu.assume_multiple %3, 128 : i32
    %c0 = arith.constant 0 : index
    %5 = arith.index_cast %4 : i32 to index
    %6 = vector.load %arg2[%c0, %5] : memref<16x128xbf16, #tpu.memory_space<vmem>>, vector<16x128xbf16>
    %c0_1 = arith.constant 0 : index
    %c0_2 = arith.constant 0 : index
    %7 = vector.load %arg6[%c0_1, %c0_2] : memref<16x128xf32, #tpu.memory_space<vmem>>, vector<16x128xf32>
    %c0_3 = arith.constant 0 : index
    %c0_4 = arith.constant 0 : index
    %8 = vector.load %arg3[%c0_3, %c0_4] : memref<128x128xbf16, #tpu.memory_space<vmem>>, vector<128x128xbf16>
    %cst = arith.constant dense<0.000000e+00> : vector<16x128xf32>
    %9 = tpu.matmul %6, %8, %cst {dimension_numbers = #tpu.dot_dimension_numbers<[1], [0], [0], [1], [0, 0, 1, 1], [], []>} : vector<16x128xbf16>, vector<128x128xbf16>, vector<16x128xf32> -> vector<16x128xf32>
    %10 = arith.addf %7, %9 : vector<16x128xf32>
    %c0_5 = arith.constant 0 : index
    %c0_6 = arith.constant 0 : index
    %11 = vector.load %arg6[%c0_5, %c0_6] : memref<16x128xf32, #tpu.memory_space<vmem>>, vector<16x128xf32>
    tpu.vector_store %arg6[%c0_5, %c0_6], %10 {strides = array<i32>} : memref<16x128xf32, #tpu.memory_space<vmem>>, vector<16x128xf32>,
    %c0_i32_7 = arith.constant 0 : i32
    %12 = arith.cmpi eq, %arg1, %c0_i32_7 : i32
    %13 = arith.extui %12 : i1 to i32
    %c0_i32_8 = arith.constant 0 : i32
    %14 = arith.cmpi ne, %13, %c0_i32_8 : i32
    scf.if %14 {
      %c0_9 = arith.constant 0 : index
      %c0_10 = arith.constant 0 : index
      %15 = vector.load %arg6[%c0_9, %c0_10] : memref<16x128xf32, #tpu.memory_space<vmem>>, vector<16x128xf32>
      %cst_11 = arith.constant dense<0.000000e+00> : vector<128xf32>
      %16 = vector.multi_reduction <add>, %15, %cst_11 [0] : vector<16x128xf32> to vector<128xf32>
      %17 = vector.shape_cast %16 : vector<128xf32> to vector<1x128xf32>
      %18 = arith.mulf %15, %15 : vector<16x128xf32>
      %cst_12 = arith.constant dense<0.000000e+00> : vector<128xf32>
      %19 = vector.multi_reduction <add>, %18, %cst_12 [0] : vector<16x128xf32> to vector<128xf32>
      %20 = vector.shape_cast %19 : vector<128xf32> to vector<1x128xf32>
      %cst_13 = arith.constant 1.250000e-01 : f32
      %21 = vector.broadcast %cst_13 : f32 to vector<1x128xf32>
      %22 = arith.mulf %17, %21 : vector<1x128xf32>
      %cst_14 = arith.constant 1.250000e-01 : f32
      %23 = vector.broadcast %cst_14 : f32 to vector<1x128xf32>
      %24 = arith.mulf %20, %23 : vector<1x128xf32>
      %25 = arith.mulf %22, %22 : vector<1x128xf32>
      %26 = arith.subf %24, %25 : vector<1x128xf32>
      %cst_15 = arith.constant 0.000000e+00 : f32
      %27 = vector.broadcast %cst_15 : f32 to vector<1x128xf32>
      %28 = arith.maximumf %26, %27 : vector<1x128xf32>
      %c0_16 = arith.constant 0 : index
      %c0_17 = arith.constant 0 : index
      %29 = vector.load %arg4[%c0_16, %c0_17] : memref<1x128xf32, #tpu.memory_space<vmem>>, vector<1x128xf32>
      %cst_18 = arith.constant 9.99999974E-6 : f32
      %30 = vector.broadcast %cst_18 : f32 to vector<1x128xf32>
      %31 = arith.addf %28, %30 : vector<1x128xf32>
      %32 = math.rsqrt %31 : vector<1x128xf32>
      %33 = arith.mulf %29, %32 : vector<1x128xf32>
      %c0_19 = arith.constant 0 : index
      %c0_20 = arith.constant 0 : index
      %34 = vector.load %arg5[%c0_19, %c0_20] : memref<1x128xf32, #tpu.memory_space<vmem>>, vector<1x128xf32>
      %35 = arith.mulf %22, %33 : vector<1x128xf32>
      %36 = arith.subf %34, %35 : vector<1x128xf32>
      %37 = vector.broadcast %33 : vector<1x128xf32> to vector<16x128xf32>
      %38 = arith.mulf %15, %37 : vector<16x128xf32>
      %39 = vector.broadcast %36 : vector<1x128xf32> to vector<16x128xf32>
      %40 = arith.addf %38, %39 : vector<16x128xf32>
      %cst_21 = arith.constant 0.000000e+00 : f32
      %41 = vector.broadcast %cst_21 : f32 to vector<16x128xf32>
      %42 = arith.maximumf %40, %41 : vector<16x128xf32>
      %c0_22 = arith.constant 0 : index
      %c0_23 = arith.constant 0 : index
      %43 = vector.load %arg6[%c0_22, %c0_23] : memref<16x128xf32, #tpu.memory_space<vmem>>, vector<16x128xf32>
      tpu.vector_store %arg6[%c0_22, %c0_23], %42 {strides = array<i32>} : memref<16x128xf32, #tpu.memory_space<vmem>>, vector<16x128xf32>,
    } else {
    }
    return
  }
  func.func @transform_0(%arg0: i32, %arg1: i32) -> (i32, i32) {
    %c0_i32 = arith.constant 0 : i32
    %c0_i32_0 = arith.constant 0 : i32
    %c0_i32_1 = arith.constant 0 : i32
    return %c0_i32, %c0_i32_0 : i32, i32
  }
  func.func @transform_1(%arg0: i32, %arg1: i32) -> (i32, i32) {
    %c0_i32 = arith.constant 0 : i32
    return %arg1, %arg0 : i32, i32
  }
  func.func @transform_2(%arg0: i32, %arg1: i32) -> (i32, i32) {
    %c0_i32 = arith.constant 0 : i32
    %c0_i32_0 = arith.constant 0 : i32
    return %c0_i32, %arg0 : i32, i32
  }
  func.func @transform_3(%arg0: i32, %arg1: i32) -> (i32, i32) {
    %c0_i32 = arith.constant 0 : i32
    %c0_i32_0 = arith.constant 0 : i32
    return %c0_i32, %arg0 : i32, i32
  }
  func.func @transform_4(%arg0: i32, %arg1: i32) -> (i32, i32) {
    %c0_i32 = arith.constant 0 : i32
    %c0_i32_0 = arith.constant 0 : i32
    return %c0_i32, %arg0 : i32, i32
  }
}

</mosaic_0001>

<llo_original>
// kernel: tpu_custom_call.1
$region0: #{tpu_custom_call.1}
  #allocation0 [shape = 'u32[]', space=smem, size = 0x4, offset = 0x4, fixed_abs, tag = 'smem constant byte address 0x4 - core index']
  #allocation1 [shape = 'u32[144,128]{1,0:T(1,128)}', space=vmem, size = 0x12000, scoped, tag = 'internal scratch']
  %s0 = inlined_call_operand.hbm [shape: bf16[16,128], index: 0, kind: input, shape index: {}]
  %s1 = inlined_call_operand.hbm [shape: bf16[128,128], index: 1, kind: input, shape index: {}]
  %s2 = inlined_call_operand.vmem [shape: f32[1,128], index: 2, kind: input, shape index: {}]
  %s3 = inlined_call_operand.vmem [shape: f32[1,128], index: 3, kind: input, shape index: {}]
  %s4 = inlined_call_operand.hbm [shape: f32[16,128], index: 4, kind: output, shape index: {}]
  %s5 = sld [smem:[#allocation0]]
  $region42: #{tpu_custom_call.1} parent=0
    _
  %s7 = ssub.s32 1, %s5
  %s8 = scalar_select 0, %s7, %s5
  $region1: #{tpu_custom_call.1} parent=0
    #allocation2 [shape = 'u8[4096]{0}', space=vmem, size = 0x1000, scoped, tag = 'input window, operand 0, single buffered']
    #allocation3 [shape = 's32[1]{0}', space=sflag, size = 0x4, scoped, tag = 'scoped memory for tpu_custom_call.1']
    #allocation4 [shape = 's32[1]{0}', space=sflag, size = 0x4, scoped, tag = 'scoped memory for tpu_custom_call.1']
    #allocation5 [shape = 'u8[32768]{0}', space=vmem, size = 0x8000, scoped, tag = 'input window, operand 1, single buffered']
    #allocation6 [shape = 's32[1]{0}', space=sflag, size = 0x4, scoped, tag = 'scoped memory for tpu_custom_call.1']
    #allocation7 [shape = 'u8[8192]{0}', space=vmem, size = 0x2000, scoped, tag = 'output window, operand 0, single buffered']
    %9 = vsyncpa [#allocation3], 0
    %10 = vsyncpa [#allocation6], 0
    %11 = vsyncpa [#allocation4], 0
    // Predicated region
    $region2: #{tpu_custom_call.1} parent=1 // pred_check
      _
    $region3: #{tpu_custom_call.1} parent=1 // pred_check_branch
      %13 = sbr.rel (0) target = $region5
    $region4: #{tpu_custom_call.1} parent=1 // pred_region
      %s15 = ssub.s32 128, 128
      %16 = vsyncadd [#allocation3], %s15
      %s17 = sshll.u32 [#allocation2], 4
      %s18 = int_to_ptr.vmem [resolvable:$true] %s17
      %23 = dma.hbm_to_vmem [thread:$0]  %s0, 128, %s18, [#allocation3], 64, 64, 4
    $region5: #{tpu_custom_call.1} parent=1 // pred_fallthru
      _
    // Predicated region
    $region6: #{tpu_custom_call.1} parent=1 // pred_check
      _
    $region7: #{tpu_custom_call.1} parent=1 // pred_check_branch
      %25 = sbr.rel (0) target = $region9
    $region8: #{tpu_custom_call.1} parent=1 // pred_region
      %s27 = ssub.s32 1024, 1024
      %28 = vsyncadd [#allocation6], %s27
      %s29 = sshll.u32 [#allocation5], 4
      %s30 = int_to_ptr.vmem [resolvable:$true] %s29
      %35 = dma.hbm_to_vmem [thread:$0]  %s1, 1024, %s30, [#allocation6], 64, 64, 4
    $region9: #{tpu_custom_call.1} parent=1 // pred_fallthru
      _
    // Predicated region
    $region10: #{tpu_custom_call.1} parent=1 // pred_check
      _
    $region11: #{tpu_custom_call.1} parent=1 // pred_check_branch
      %37 = sbr.rel (0) target = $region13
    $region12: #{tpu_custom_call.1} parent=1 // pred_region
      _
    $region13: #{tpu_custom_call.1} parent=1 // pred_fallthru
      _
    // Predicated region
    $region14: #{tpu_custom_call.1} parent=1 // pred_check
      _
    $region15: #{tpu_custom_call.1} parent=1 // pred_check_branch
      %39 = sbr.rel (0) target = $region17
    $region16: #{tpu_custom_call.1} parent=1 // pred_region
      _
    $region17: #{tpu_custom_call.1} parent=1 // pred_fallthru
      _
    // Predicated region
    $region18: #{tpu_custom_call.1} parent=1 // pred_check
      _
    $region19: #{tpu_custom_call.1} parent=1 // pred_check_branch
      %41 = sbr.rel (0) target = $region21
    $region20: #{tpu_custom_call.1} parent=1 // pred_region
      %42 = dma.done [#allocation3], 128
    $region21: #{tpu_custom_call.1} parent=1 // pred_fallthru
      _
    // Predicated region
    $region22: #{tpu_custom_call.1} parent=1 // pred_check
      _
    $region23: #{tpu_custom_call.1} parent=1 // pred_check_branch
      %44 = sbr.rel (0) target = $region25
    $region24: #{tpu_custom_call.1} parent=1 // pred_region
      %45 = dma.done [#allocation6], 1024
    $region25: #{tpu_custom_call.1} parent=1 // pred_fallthru
      _
    %p47 = scmp.eq.s32.totalorder 0, 0
    // Predicated region
    $region26: #{tpu_custom_call.1} parent=1 // pred_check
      %p48 = pneg %p47
    $region27: #{tpu_custom_call.1} parent=1 // pred_check_branch
      %50 = sbr.rel (%p48) target = $region29
    $region28: #{tpu_custom_call.1} parent=1 // pred_region
      %51 = vst [vmem:[#allocation7] sm:$0xff] 0.0
      %52 = vst [vmem:[#allocation7 + $0x8] sm:$0xff] 0.0
    $region29: #{tpu_custom_call.1} parent=1 // pred_fallthru
      _
    %s53 = smul.u32 0, 128
    %s54 = sshra.s32 %s53, 7
    %s55 = sand.u32 %s53, 127
    %s56 = smul.addr %s54, 4
    %s57 = scalar_lea.vmem [#allocation2], %s56
    %v58 = vld [vmem:[%s57] sm:$0xf]
    %v59 = vld [vmem:[%s57 + $0x4] sm:$0xf]
    %v60 = vld [vmem:[#allocation7] sm:$0xff]
    %v61 = vld [vmem:[#allocation7 + $0x8] sm:$0xff]
    %v62 = vld [vmem:[#allocation5] sm:$0xf]
    %v63 = vld [vmem:[#allocation5 + $0x4] sm:$0xf]
    %v64 = vld [vmem:[#allocation5 + $0x8] sm:$0xf]
    %v65 = vld [vmem:[#allocation5 + $0xc] sm:$0xf]
    %v66 = vld [vmem:[#allocation5 + $0x10] sm:$0xf]
    %v67 = vld [vmem:[#allocation5 + $0x14] sm:$0xf]
    %v68 = vld [vmem:[#allocation5 + $0x18] sm:$0xf]
    %v69 = vld [vmem:[#allocation5 + $0x1c] sm:$0xf]
    %v70 = vld [vmem:[#allocation5 + $0x20] sm:$0xf]
    %v71 = vld [vmem:[#allocation5 + $0x24] sm:$0xf]
    %v72 = vld [vmem:[#allocation5 + $0x28] sm:$0xf]
    %v73 = vld [vmem:[#allocation5 + $0x2c] sm:$0xf]
    %v74 = vld [vmem:[#allocation5 + $0x30] sm:$0xf]
    %v75 = vld [vmem:[#allocation5 + $0x34] sm:$0xf]
    %v76 = vld [vmem:[#allocation5 + $0x38] sm:$0xf]
    %v77 = vld [vmem:[#allocation5 + $0x3c] sm:$0xf]
    %v80 = vunpack.c.l.b16 %v58
    %v81 = vunpack.c.l.b16 %v59
    %v82 = vpack.c.b16 %v81, %v80
    %v100 = vunpack.c.l.b16 %v62
    %v101 = vunpack.c.l.b16 %v63
    %v102 = vunpack.c.l.b16 %v64
    %v103 = vunpack.c.l.b16 %v65
    %v104 = vunpack.c.l.b16 %v66
    %v105 = vunpack.c.l.b16 %v67
    %v106 = vunpack.c.l.b16 %v68
    %v107 = vunpack.c.l.b16 %v69
    %v108 = vunpack.c.l.b16 %v70
    %v109 = vunpack.c.l.b16 %v71
    %v110 = vunpack.c.l.b16 %v72
    %v111 = vunpack.c.l.b16 %v73
    %v112 = vunpack.c.l.b16 %v74
    %v113 = vunpack.c.l.b16 %v75
    %v114 = vunpack.c.l.b16 %v76
    %v115 = vunpack.c.l.b16 %v77
    %v116 = vpack.c.b16 %v101, %v100
    %v117 = vpack.c.b16 %v103, %v102
    %v118 = vpack.c.b16 %v105, %v104
    %v119 = vpack.c.b16 %v107, %v106
    %v120 = vpack.c.b16 %v109, %v108
    %v121 = vpack.c.b16 %v111, %v110
    %v122 = vpack.c.b16 %v113, %v112
    %v123 = vpack.c.b16 %v115, %v114
    %132 = vmatprep.subr.bf16.mxu0 0
    %133 = vmatpush1.bf16.msra.mxu0 %v116
    %134 = vmatprep.subr.bf16.mxu0 0
    %135 = vmatpush1.bf16.msra.mxu0 %v117
    %136 = vmatprep.subr.bf16.mxu0 0
    %137 = vmatpush1.bf16.msra.mxu0 %v118
    %138 = vmatprep.subr.bf16.mxu0 0
    %139 = vmatpush1.bf16.msra.mxu0 %v119
    %140 = vmatprep.subr.bf16.mxu0 0
    %141 = vmatpush1.bf16.msra.mxu0 %v120
    %142 = vmatprep.subr.bf16.mxu0 0
    %143 = vmatpush1.bf16.msra.mxu0 %v121
    %144 = vmatprep.subr.bf16.mxu0 0
    %145 = vmatpush1.bf16.msra.mxu0 %v122
    %146 = vmatprep.subr.bf16.mxu0 0
    %147 = vmatpush1.bf16.msra.mxu0 %v123
    %148 = vmatprep.subr.bf16.mxu0 0
    %149 = vmatpush1.bf16.msra.mxu0 0
    %150 = vmatprep.subr.bf16.mxu0 0
    %151 = vmatpush1.bf16.msra.mxu0 0
    %152 = vmatprep.subr.bf16.mxu0 0
    %153 = vmatpush1.bf16.msra.mxu0 0
    %154 = vmatprep.subr.bf16.mxu0 0
    %155 = vmatpush1.bf16.msra.mxu0 0
    %156 = vmatprep.subr.bf16.mxu0 0
    %157 = vmatpush1.bf16.msra.mxu0 0
    %158 = vmatprep.subr.bf16.mxu0 0
    %159 = vmatpush1.bf16.msra.mxu0 0
    %160 = vmatprep.subr.bf16.mxu0 0
    %161 = vmatpush1.bf16.msra.mxu0 0
    %162 = vmatprep.subr.bf16.mxu0 0
    %163 = vmatpush1.bf16.msra.mxu0 0
    %164 = vmatprep.mubr.bf16.mxu0 0
    %165 = vmatmul.mubr.bf16.gmra.mrb[0].mxu0 %v82
    %v166 = vpop.f32.mrb[0].mxu0
    %v167 = vadd.f32 0.0, %v166
    %v168 = vpop.f32.mrb[0].mxu0
    %v169 = vpop.f32.mrb[0].mxu0
    %v170 = vadd.f32 0.0, %v169
    %v171 = vpop.f32.mrb[0].mxu0
    %172 = vdwg.mxu0
    %v173 = vadd.f32 %v60, %v167
    %v174 = vadd.f32 %v61, %v170
    %175 = vst [vmem:[#allocation7] sm:$0xff] %v173
    %176 = vst [vmem:[#allocation7 + $0x8] sm:$0xff] %v174
    // Predicated region
    $region30: #{tpu_custom_call.1} parent=1 // pred_check
      %p177 = pneg %p47
    $region31: #{tpu_custom_call.1} parent=1 // pred_check_branch
      %179 = sbr.rel (%p177) target = $region33
    $region32: #{tpu_custom_call.1} parent=1 // pred_region
      %v180 = vld [vmem:[#allocation7] sm:$0xff]
      %v181 = vld [vmem:[#allocation7 + $0x8] sm:$0xff]
      %v182 = vadd.f32 %v180, %v181
      %v183 = vrot.slane %v182, 4
      %v184 = vadd.f32 %v182, %v183
      %v185 = vrot.slane %v184, 2
      %v186 = vadd.f32 %v184, %v185
      %v187 = vrot.slane %v186, 1
      %v188 = vadd.f32 %v186, %v187
      %v189 = vmul.f32 %v180, %v180
      %v190 = vmul.f32 %v181, %v181
      %v191 = vadd.f32 %v189, %v190
      %v192 = vrot.slane %v191, 4
      %v193 = vadd.f32 %v191, %v192
      %v194 = vrot.slane %v193, 2
      %v195 = vadd.f32 %v193, %v194
      %v196 = vrot.slane %v195, 1
      %v197 = vadd.f32 %v195, %v196
      %v198 = vmul.f32 %v188, 0.125
      %v199 = vmul.f32 %v197, 0.125
      %v200 = vmul.f32 %v198, %v198
      %v201 = vsub.f32 %v199, %v200
      %v202 = vmax.f32 %v201, 0.0
      %v203 = vld [vmem:[%s2] sm:$0x1]
      %v204 = vadd.f32 %v202, 1e-05
      %v205 = vrsqrt.pop %v204
      %v206 = vmul.f32 %v203, %v205
      %v207 = vld [vmem:[%s3] sm:$0x1]
      %v208 = vmul.f32 %v198, %v206
      %v209 = vsub.f32 %v207, %v208
      %v211 = vlaneseq
      %v212 = vshrl.u32 %v211, 7
      %v213 = vsub.s32 0, %v212
      %v214 = vrot.slane %v206, %v213
      %v216 = vmul.f32 %v180, %v214
      %v217 = vmul.f32 %v181, %v214
      %v219 = vlaneseq
      %v220 = vshrl.u32 %v219, 7
      %v221 = vsub.s32 0, %v220
      %v222 = vrot.slane %v209, %v221
      %v224 = vadd.f32 %v216, %v222
      %v225 = vadd.f32 %v217, %v222
      %v226 = vmax.f32 %v224, 0.0
      %v227 = vmax.f32 %v225, 0.0
      %228 = vst [vmem:[#allocation7] sm:$0xff] %v226
      %229 = vst [vmem:[#allocation7 + $0x8] sm:$0xff] %v227
    $region33: #{tpu_custom_call.1} parent=1 // pred_fallthru
      _
    // Predicated region
    $region34: #{tpu_custom_call.1} parent=1 // pred_check
      _
    $region35: #{tpu_custom_call.1} parent=1 // pred_check_branch
      %231 = sbr.rel (0) target = $region37
    $region36: #{tpu_custom_call.1} parent=1 // pred_region
      %s233 = ssub.s32 256, 256
      %234 = vsyncadd [#allocation4], %s233
      %s235 = sshll.u32 [#allocation7], 4
      %s236 = int_to_ptr.vmem [resolvable:$true] %s235
      %241 = dma.vmem_to_hbm [thread:$0]  %s236, 256, %s4, [#allocation4], 128, 128, 8
    $region37: #{tpu_custom_call.1} parent=1 // pred_fallthru
      _
    // Predicated region
    $region38: #{tpu_custom_call.1} parent=1 // pred_check
      _
    $region39: #{tpu_custom_call.1} parent=1 // pred_check_branch
      %243 = sbr.rel (0) target = $region41
    $region40: #{tpu_custom_call.1} parent=1 // pred_region
      %244 = dma.done [#allocation4], 256
    $region41: #{tpu_custom_call.1} parent=1 // pred_fallthru
      _
    %245 = vsyncpa [#allocation3], 1
    %246 = vsyncpa [#allocation6], 1
    %247 = vsyncpa [#allocation4], 1

</llo_original>
